<compile_context>
chip_gen: v5e
topology: v5e:2x2
jax: 0.10.0
libtpu: 0.0.40
codegen_flags: <defaults>
</compile_context>

<pallas_src>
import functools

import jax
import jax.numpy as jnp
import numpy as np
from jax.experimental import pallas as pl
from jax.experimental.pallas import tpu as pltpu


def _triplet_kernel(anchor_ref, positive_ref, negative_ref, out_ref, *, margin, inv_d):
    # Zero the resident (1,1) accumulator on the first grid step.
    @pl.when(pl.program_id(0) == 0)
    def _init():
        out_ref[...] = jnp.zeros_like(out_ref)

    a = anchor_ref[...].astype(jnp.float32)      # (TB, D)
    p = positive_ref[...].astype(jnp.float32)    # (TB, D)
    n = negative_ref[...].astype(jnp.float32)    # (TB, N, D)
    n_count = float(negative_ref.shape[1])

    # --- l2norm: x * rsqrt(sum(x^2) + 1e-10)  (rsqrt -> EUP slot) ---
    a_ss = jnp.sum(a * a, axis=-1, keepdims=True)            # (TB, 1)
    p_ss = jnp.sum(p * p, axis=-1, keepdims=True)            # (TB, 1)
    n_ss = jnp.sum(n * n, axis=-1, keepdims=True)            # (TB, N, 1)
    a_inv = jax.lax.rsqrt(a_ss + 1e-10)
    p_inv = jax.lax.rsqrt(p_ss + 1e-10)
    n_inv = jax.lax.rsqrt(n_ss + 1e-10)
    a_hat = a * a_inv                                        # (TB, D)
    p_hat = p * p_inv                                        # (TB, D)

    # f_a_p[b] = sum_d (p_hat - a_hat)^2
    d_ap = p_hat - a_hat
    f_a_p = jnp.sum(d_ap * d_ap, axis=-1, keepdims=True)     # (TB, 1)

    # f_a_n[b] = (1/D) * sum_{j,d} (p_hat[b,d] - n_hat[b,j,d])^2
    #          = (1/D) * ( N*||p_hat||^2 - 2*p_hat.(sum_j n_hat_j) + sum_j ||n_hat_j||^2 )
    # Reuse the normalization sums; do NOT substitute 1 for the norms (the
    # +1e-10 eps means normalized rows are not exactly unit norm).
    p_hat_ss = p_ss * (p_inv * p_inv)                        # (TB, 1) = ||p_hat||^2
    n_hat_sum = jnp.sum(n * n_inv, axis=1)                   # (TB, D) = sum_j n_hat_j
    n_hat_ss = n_ss * (n_inv * n_inv)                        # (TB, N, 1) = ||n_hat_j||^2
    n_hat_ss_sum = jnp.sum(n_hat_ss, axis=1)                 # (TB, 1)
    cross = jnp.sum(p_hat * n_hat_sum, axis=-1, keepdims=True)  # (TB, 1)
    f_a_n = (n_count * p_hat_ss - 2.0 * cross + n_hat_ss_sum) * inv_d  # (TB, 1)

    # hard_triplets gather replaced by an equivalent mask (excluded rows add 0).
    hard = f_a_n < f_a_p
    err = jnp.maximum(f_a_p - f_a_n + margin, 0.0)
    err = jnp.where(hard, err, 0.0)

    out_ref[...] += jnp.sum(err, axis=0, keepdims=True)      # accumulate (1, 1)


def triplet_loss(anchor, positive, negative, margin, *, block_b=None):
    """anchor: (B, D), positive: (B, D), negative: (B, N, D) -> (1,) float32.

    Inputs may be f32 or bf16 (bf16 halves HBM traffic; compute stays f32).
    """
    B, D = anchor.shape
    Bn, N, Dn = negative.shape
    assert Bn == B and Dn == D, "shape mismatch between anchor/positive and negative"

    itemsize = jnp.dtype(negative.dtype).itemsize
    row_bytes = N * D * itemsize

    # Choose the batch tile: target ~4 MiB for the negative block per pipeline
    # buffer (comfortable under the 32 MiB scoped default and far under v7x's
    # 64 MiB physical VMEM once f32 temporaries are accounted for).
    if block_b is None:
        target = 4 * 1024 * 1024
        tb = max(1, target // max(row_bytes, 1))
        tb = int(min(B, tb))
    else:
        tb = int(min(B, block_b))
    tb = max(8, (tb // 8) * 8)            # sublane-aligned batch tile

    # Pad B to a multiple of tb. Zero rows contribute exactly 0 to the loss
    # (f_a_p = f_a_n = 0 -> hard mask False).
    pad = (-B) % tb
    if pad:
        anchor = jnp.pad(anchor, ((0, pad), (0, 0)))
        positive = jnp.pad(positive, ((0, pad), (0, 0)))
        negative = jnp.pad(negative, ((0, pad), (0, 0), (0, 0)))
    Bp = B + pad
    num_blocks = Bp // tb

    # VMEM budget: double-buffered input blocks + in-kernel f32 temporaries.
    block_in_bytes = (tb * N * D + 2 * tb * D) * itemsize
    vmem_need = 2 * block_in_bytes + 4 * tb * N * D * 4 + (1 << 20)
    vmem_limit = int(min(max(vmem_need, 32 * 1024 * 1024), 56 * 1024 * 1024))

    cost = pl.CostEstimate(
        flops=int(5 * Bp * N * D + 10 * Bp * D),
        transcendentals=int(Bp * (N + 2)),
        bytes_accessed=int((Bp * N * D + 2 * Bp * D) * itemsize + 4),
    )

    kernel = functools.partial(_triplet_kernel, margin=float(margin), inv_d=1.0 / D)
    out = pl.pallas_call(
        kernel,
        out_shape=jax.ShapeDtypeStruct((1, 1), jnp.float32),
        grid=(num_blocks,),
        in_specs=[
            pl.BlockSpec((tb, D), lambda i: (i, 0)),
            pl.BlockSpec((tb, D), lambda i: (i, 0)),
            pl.BlockSpec((tb, N, D), lambda i: (i, 0, 0)),
        ],
        out_specs=pl.BlockSpec((1, 1), lambda i: (0, 0)),
        compiler_params=pltpu.CompilerParams(
            dimension_semantics=("arbitrary",),   # resident (1,1) accumulator
            vmem_limit_bytes=vmem_limit,
        ),
        cost_estimate=cost,
    )(anchor, positive, negative)
    return out.reshape((1,))


def _l2norm_ref(x):
    denom = jnp.sum(x * x, axis=-1, keepdims=True)
    denom = jnp.sqrt(jnp.maximum(denom, 0.0) + 1e-10)
    return x / denom


def _reference(anchor, positive, negative, margin):
    # Pure-JAX mirror of the PyTorch module (explicit broadcast form),
    # used to validate the in-kernel algebraic rewrite.
    a = _l2norm_ref(anchor.astype(jnp.float32))
    p = _l2norm_ref(positive.astype(jnp.float32))
    n = _l2norm_ref(negative.astype(jnp.float32))
    f_a_p = jnp.sum((p - a) ** 2, axis=1)                     # (B,)
    f_a_n = jnp.sum((p[:, None, :] - n) ** 2, axis=1)         # (B, D)
    f_a_n = jnp.mean(f_a_n, axis=-1)                          # (B,)
    hard = f_a_n < f_a_p
    err = jnp.maximum(f_a_p - f_a_n + margin, 0.0)
    err = jnp.where(hard, err, 0.0)
    return jnp.sum(err, axis=-1, keepdims=True)               # (1,)


if __name__ == "__main__":
    key = jax.random.PRNGKey(0)
    k1, k2, k3 = jax.random.split(key, 3)

    B, N, D = 8, 8, 32
    margin = 0.2

    anchor = jax.random.normal(k1, (B, D), dtype=jnp.float32)
    positive = jax.random.normal(k2, (B, D), dtype=jnp.float32)
    negative = jax.random.normal(k3, (B, N, D), dtype=jnp.float32)

    out = triplet_loss(anchor, positive, negative, margin)
    jax.block_until_ready(out)

    ref = _reference(anchor, positive, negative, margin)
    np.testing.assert_allclose(np.asarray(out), np.asarray(ref), rtol=1e-5, atol=1e-5)

    print("KERNEL_OK")
</pallas_src>

<mosaic_0001>
module attributes {stable_mosaic.version = 11 : i64} {
  func.func @_triplet_kernel(%arg0: i32, %arg1: memref<8x32xf32, #tpu.memory_space<vmem>>, %arg2: memref<8x32xf32, #tpu.memory_space<vmem>>, %arg3: memref<8x8x32xf32, #tpu.memory_space<vmem>>, %arg4: memref<1x1xf32, #tpu.memory_space<vmem>>) attributes {dimension_semantics = [#tpu.dimension_semantics<arbitrary>], iteration_bounds = array<i64: 1>, scalar_prefetch = 0 : i64, scratch_operands = 0 : i64, tpu.core_type = #tpu.core_type<tc>, window_params = [{transform_indices = @transform_0, window_bounds = array<i64: 8, 32>}, {transform_indices = @transform_1, window_bounds = array<i64: 8, 32>}, {transform_indices = @transform_2, window_bounds = array<i64: 8, 8, 32>}, {pipeline_mode = #tpu.pipeline_mode<synchronous>, transform_indices = @transform_3, window_bounds = array<i64: 1, 1>}]} {
    %c0_i32 = arith.constant 0 : i32
    %0 = arith.cmpi eq, %arg0, %c0_i32 : i32
    %1 = arith.extui %0 : i1 to i32
    %c0_i32_0 = arith.constant 0 : i32
    %2 = arith.cmpi ne, %1, %c0_i32_0 : i32
    scf.if %2 {
      %cst_27 = arith.constant 0.000000e+00 : f32
      %64 = vector.broadcast %cst_27 : f32 to vector<1x1xf32>
      %c0_28 = arith.constant 0 : index
      %c0_29 = arith.constant 0 : index
      %65 = vector.load %arg4[%c0_28, %c0_29] : memref<1x1xf32, #tpu.memory_space<vmem>>, vector<1x1xf32>
      tpu.vector_store %arg4[%c0_28, %c0_29], %64 {strides = array<i32>} : memref<1x1xf32, #tpu.memory_space<vmem>>, vector<1x1xf32>,
    } else {
    }
    %c0 = arith.constant 0 : index
    %c0_1 = arith.constant 0 : index
    %3 = vector.load %arg1[%c0, %c0_1] : memref<8x32xf32, #tpu.memory_space<vmem>>, vector<8x32xf32>
    %c0_2 = arith.constant 0 : index
    %c0_3 = arith.constant 0 : index
    %4 = vector.load %arg2[%c0_2, %c0_3] : memref<8x32xf32, #tpu.memory_space<vmem>>, vector<8x32xf32>
    %c0_4 = arith.constant 0 : index
    %c0_5 = arith.constant 0 : index
    %c0_6 = arith.constant 0 : index
    %5 = vector.load %arg3[%c0_4, %c0_5, %c0_6] : memref<8x8x32xf32, #tpu.memory_space<vmem>>, vector<8x8x32xf32>
    %6 = arith.mulf %3, %3 : vector<8x32xf32>
    %cst = arith.constant dense<0.000000e+00> : vector<8xf32>
    %7 = vector.multi_reduction <add>, %6, %cst [1] : vector<8x32xf32> to vector<8xf32>
    %8 = vector.shape_cast %7 : vector<8xf32> to vector<8x1xf32>
    %9 = arith.mulf %4, %4 : vector<8x32xf32>
    %cst_7 = arith.constant dense<0.000000e+00> : vector<8xf32>
    %10 = vector.multi_reduction <add>, %9, %cst_7 [1] : vector<8x32xf32> to vector<8xf32>
    %11 = vector.shape_cast %10 : vector<8xf32> to vector<8x1xf32>
    %12 = arith.mulf %5, %5 : vector<8x8x32xf32>
    %cst_8 = arith.constant dense<0.000000e+00> : vector<8x8xf32>
    %13 = vector.multi_reduction <add>, %12, %cst_8 [2] : vector<8x8x32xf32> to vector<8x8xf32>
    %14 = vector.shape_cast %13 : vector<8x8xf32> to vector<8x8x1xf32>
    %cst_9 = arith.constant 1.000000e-10 : f32
    %15 = vector.broadcast %cst_9 : f32 to vector<8x1xf32>
    %16 = arith.addf %8, %15 : vector<8x1xf32>
    %17 = math.rsqrt %16 : vector<8x1xf32>
    %cst_10 = arith.constant 1.000000e-10 : f32
    %18 = vector.broadcast %cst_10 : f32 to vector<8x1xf32>
    %19 = arith.addf %11, %18 : vector<8x1xf32>
    %20 = math.rsqrt %19 : vector<8x1xf32>
    %cst_11 = arith.constant 1.000000e-10 : f32
    %21 = vector.broadcast %cst_11 : f32 to vector<8x8x1xf32>
    %22 = arith.addf %14, %21 : vector<8x8x1xf32>
    %23 = math.rsqrt %22 : vector<8x8x1xf32>
    %24 = vector.broadcast %17 : vector<8x1xf32> to vector<8x32xf32>
    %25 = arith.mulf %3, %24 : vector<8x32xf32>
    %26 = vector.broadcast %20 : vector<8x1xf32> to vector<8x32xf32>
    %27 = arith.mulf %4, %26 : vector<8x32xf32>
    %28 = arith.subf %27, %25 : vector<8x32xf32>
    %29 = arith.mulf %28, %28 : vector<8x32xf32>
    %cst_12 = arith.constant dense<0.000000e+00> : vector<8xf32>
    %30 = vector.multi_reduction <add>, %29, %cst_12 [1] : vector<8x32xf32> to vector<8xf32>
    %31 = vector.shape_cast %30 : vector<8xf32> to vector<8x1xf32>
    %32 = arith.mulf %20, %20 : vector<8x1xf32>
    %33 = arith.mulf %11, %32 : vector<8x1xf32>
    %34 = vector.broadcast %23 : vector<8x8x1xf32> to vector<8x8x32xf32>
    %35 = arith.mulf %5, %34 : vector<8x8x32xf32>
    %cst_13 = arith.constant dense<0.000000e+00> : vector<8x32xf32>
    %36 = vector.multi_reduction <add>, %35, %cst_13 [1] : vector<8x8x32xf32> to vector<8x32xf32>
    %37 = arith.mulf %23, %23 : vector<8x8x1xf32>
    %38 = arith.mulf %14, %37 : vector<8x8x1xf32>
    %cst_14 = arith.constant dense<0.000000e+00> : vector<8x1xf32>
    %39 = vector.multi_reduction <add>, %38, %cst_14 [1] : vector<8x8x1xf32> to vector<8x1xf32>
    %40 = arith.mulf %27, %36 : vector<8x32xf32>
    %cst_15 = arith.constant dense<0.000000e+00> : vector<8xf32>
    %41 = vector.multi_reduction <add>, %40, %cst_15 [1] : vector<8x32xf32> to vector<8xf32>
    %42 = vector.shape_cast %41 : vector<8xf32> to vector<8x1xf32>
    %cst_16 = arith.constant 8.000000e+00 : f32
    %43 = vector.broadcast %cst_16 : f32 to vector<8x1xf32>
    %44 = arith.mulf %43, %33 : vector<8x1xf32>
    %cst_17 = arith.constant 2.000000e+00 : f32
    %45 = vector.broadcast %cst_17 : f32 to vector<8x1xf32>
    %46 = arith.mulf %45, %42 : vector<8x1xf32>
    %47 = arith.subf %44, %46 : vector<8x1xf32>
    %48 = arith.addf %47, %39 : vector<8x1xf32>
    %cst_18 = arith.constant 3.125000e-02 : f32
    %49 = vector.broadcast %cst_18 : f32 to vector<8x1xf32>
    %50 = arith.mulf %48, %49 : vector<8x1xf32>
    %51 = arith.cmpf olt, %50, %31 : vector<8x1xf32>
    %52 = arith.subf %31, %50 : vector<8x1xf32>
    %cst_19 = arith.constant 2.000000e-01 : f32
    %53 = vector.broadcast %cst_19 : f32 to vector<8x1xf32>
    %54 = arith.addf %52, %53 : vector<8x1xf32>
    %cst_20 = arith.constant 0.000000e+00 : f32
    %55 = vector.broadcast %cst_20 : f32 to vector<8x1xf32>
    %56 = arith.maximumf %54, %55 : vector<8x1xf32>
    %cst_21 = arith.constant 0.000000e+00 : f32
    %57 = vector.broadcast %cst_21 : f32 to vector<8x1xf32>
    %58 = arith.select %51, %56, %57 : vector<8x1xi1>, vector<8x1xf32>
    %c0_22 = arith.constant 0 : index
    %c0_23 = arith.constant 0 : index
    %59 = vector.load %arg4[%c0_22, %c0_23] : memref<1x1xf32, #tpu.memory_space<vmem>>, vector<1x1xf32>
    %cst_24 = arith.constant dense<0.000000e+00> : vector<1xf32>
    %60 = vector.multi_reduction <add>, %58, %cst_24 [0] : vector<8x1xf32> to vector<1xf32>
    %61 = vector.shape_cast %60 : vector<1xf32> to vector<1x1xf32>
    %62 = arith.addf %59, %61 : vector<1x1xf32>
    %c0_25 = arith.constant 0 : index
    %c0_26 = arith.constant 0 : index
    %63 = vector.load %arg4[%c0_25, %c0_26] : memref<1x1xf32, #tpu.memory_space<vmem>>, vector<1x1xf32>
    tpu.vector_store %arg4[%c0_25, %c0_26], %62 {strides = array<i32>} : memref<1x1xf32, #tpu.memory_space<vmem>>, vector<1x1xf32>,
    return
  }
  func.func @transform_0(%arg0: i32) -> (i32, i32) {
    %c0_i32 = arith.constant 0 : i32
    %c0_i32_0 = arith.constant 0 : i32
    return %arg0, %c0_i32 : i32, i32
  }
  func.func @transform_1(%arg0: i32) -> (i32, i32) {
    %c0_i32 = arith.constant 0 : i32
    %c0_i32_0 = arith.constant 0 : i32
    return %arg0, %c0_i32 : i32, i32
  }
  func.func @transform_2(%arg0: i32) -> (i32, i32, i32) {
    %c0_i32 = arith.constant 0 : i32
    %c0_i32_0 = arith.constant 0 : i32
    %c0_i32_1 = arith.constant 0 : i32
    return %arg0, %c0_i32, %c0_i32_0 : i32, i32, i32
  }
  func.func @transform_3(%arg0: i32) -> (i32, i32) {
    %c0_i32 = arith.constant 0 : i32
    %c0_i32_0 = arith.constant 0 : i32
    %c0_i32_1 = arith.constant 0 : i32
    return %c0_i32, %c0_i32_0 : i32, i32
  }
}

</mosaic_0001>

<llo_original>
// kernel: tpu_custom_call.1
$region0: #{tpu_custom_call.1}
  #allocation0 [shape = 'u32[]', space=smem, size = 0x4, offset = 0x4, fixed_abs, tag = 'smem constant byte address 0x4 - core index']
  #allocation1 [shape = 'u32[72,128]{1,0:T(1,128)}', space=vmem, size = 0x9000, scoped, tag = 'internal scratch']
  %s0 = inlined_call_operand.hbm [shape: f32[8,32], index: 0, kind: input, shape index: {}]
  %s1 = inlined_call_operand.hbm [shape: f32[8,32], index: 1, kind: input, shape index: {}]
  %s2 = inlined_call_operand.hbm [shape: f32[8,8,32], index: 2, kind: input, shape index: {}]
  %s3 = inlined_call_operand.hbm [shape: f32[1,1], index: 3, kind: output, shape index: {}]
  %s4 = sld [smem:[#allocation0]]
  $region38: #{tpu_custom_call.1} parent=0
    _
  %s6 = ssub.s32 1, %s4
  %s7 = scalar_select 0, %s6, %s4
  $region1: #{tpu_custom_call.1} parent=0
    #allocation2 [shape = 'u8[4096]{0}', space=vmem, size = 0x1000, scoped, tag = 'input window, operand 0, single buffered']
    #allocation3 [shape = 's32[1]{0}', space=sflag, size = 0x4, scoped, tag = 'scoped memory for tpu_custom_call.1']
    #allocation4 [shape = 's32[1]{0}', space=sflag, size = 0x4, scoped, tag = 'scoped memory for tpu_custom_call.1']
    #allocation5 [shape = 'u8[4096]{0}', space=vmem, size = 0x1000, scoped, tag = 'input window, operand 1, single buffered']
    #allocation6 [shape = 's32[1]{0}', space=sflag, size = 0x4, scoped, tag = 'scoped memory for tpu_custom_call.1']
    #allocation7 [shape = 'u8[32768]{0}', space=vmem, size = 0x8000, scoped, tag = 'input window, operand 2, single buffered']
    #allocation8 [shape = 'u8[512]{0}', space=vmem, size = 0x400, scoped, tag = 'output window, operand 0, single buffered']
    %8 = vsyncpa [#allocation3], 0
    %9 = vsyncpa [#allocation6], 0
    %10 = vsyncpa [#allocation4], 0
    // Predicated region
    $region2: #{tpu_custom_call.1} parent=1 // pred_check
      _
    $region3: #{tpu_custom_call.1} parent=1 // pred_check_branch
      %12 = sbr.rel (0) target = $region5
    $region4: #{tpu_custom_call.1} parent=1 // pred_region
      %14 = vsyncadd [#allocation3], 0
      %s16 = sshll.u32 %s0, 4
      %s17 = int_to_ptr.hbm [resolvable:$true] %s16
      %s18 = sshll.u32 [#allocation2], 4
      %s19 = int_to_ptr.vmem [resolvable:$true] %s18
      %21 = dma.hbm_to_vmem [thread:$0]  %s17, 128, %s19, [#allocation3]
    $region5: #{tpu_custom_call.1} parent=1 // pred_fallthru
      _
    // Predicated region
    $region6: #{tpu_custom_call.1} parent=1 // pred_check
      _
    $region7: #{tpu_custom_call.1} parent=1 // pred_check_branch
      %23 = sbr.rel (0) target = $region9
    $region8: #{tpu_custom_call.1} parent=1 // pred_region
      %25 = vsyncadd [#allocation6], 0
      %s27 = sshll.u32 %s1, 4
      %s28 = int_to_ptr.hbm [resolvable:$true] %s27
      %s29 = sshll.u32 [#allocation5], 4
      %s30 = int_to_ptr.vmem [resolvable:$true] %s29
      %32 = dma.hbm_to_vmem [thread:$0]  %s28, 128, %s30, [#allocation6]
    $region9: #{tpu_custom_call.1} parent=1 // pred_fallthru
      _
    // Predicated region
    $region10: #{tpu_custom_call.1} parent=1 // pred_check
      _
    $region11: #{tpu_custom_call.1} parent=1 // pred_check_branch
      %34 = sbr.rel (0) target = $region13
    $region12: #{tpu_custom_call.1} parent=1 // pred_region
      %36 = vsyncadd [#allocation6], 0
      %s37 = sshll.u32 %s2, 4
      %s38 = int_to_ptr.hbm [resolvable:$true] %s37
      %s39 = sshll.u32 [#allocation7], 4
      %s40 = int_to_ptr.vmem [resolvable:$true] %s39
      %45 = dma.hbm_to_vmem [thread:$0]  %s38, 1024, %s40, [#allocation6], 128, 128, 8
    $region13: #{tpu_custom_call.1} parent=1 // pred_fallthru
      _
    // Predicated region
    $region14: #{tpu_custom_call.1} parent=1 // pred_check
      _
    $region15: #{tpu_custom_call.1} parent=1 // pred_check_branch
      %47 = sbr.rel (0) target = $region17
    $region16: #{tpu_custom_call.1} parent=1 // pred_region
      %49 = dma.done [#allocation3], 128
    $region17: #{tpu_custom_call.1} parent=1 // pred_fallthru
      _
    // Predicated region
    $region18: #{tpu_custom_call.1} parent=1 // pred_check
      _
    $region19: #{tpu_custom_call.1} parent=1 // pred_check_branch
      %51 = sbr.rel (0) target = $region21
    $region20: #{tpu_custom_call.1} parent=1 // pred_region
      %53 = dma.done [#allocation6], 128
    $region21: #{tpu_custom_call.1} parent=1 // pred_fallthru
      _
    // Predicated region
    $region22: #{tpu_custom_call.1} parent=1 // pred_check
      _
    $region23: #{tpu_custom_call.1} parent=1 // pred_check_branch
      %55 = sbr.rel (0) target = $region25
    $region24: #{tpu_custom_call.1} parent=1 // pred_region
      %57 = dma.done [#allocation6], 1024
    $region25: #{tpu_custom_call.1} parent=1 // pred_fallthru
      _
    %p58 = scmp.eq.s32.totalorder 0, 0
    // Predicated region
    $region26: #{tpu_custom_call.1} parent=1 // pred_check
      %p59 = pneg %p58
    $region27: #{tpu_custom_call.1} parent=1 // pred_check_branch
      %61 = sbr.rel (%p59) target = $region29
    $region28: #{tpu_custom_call.1} parent=1 // pred_region
      %vm62 = vcmask 0
      %63 = vst.msk [vmem:[#allocation8] sm:$0x1] %vm62, 0.0
    $region29: #{tpu_custom_call.1} parent=1 // pred_fallthru
      _
    %v64 = vld [vmem:[#allocation2] sm:$0xff]
    %v65 = vld [vmem:[#allocation5] sm:$0xff]
    %v66 = vld [vmem:[#allocation7] sm:$0xff]
    %v67 = vld [vmem:[#allocation7 + $0x8] sm:$0xff]
    %v68 = vld [vmem:[#allocation7 + $0x10] sm:$0xff]
    %v69 = vld [vmem:[#allocation7 + $0x18] sm:$0xff]
    %v70 = vld [vmem:[#allocation7 + $0x20] sm:$0xff]
    %v71 = vld [vmem:[#allocation7 + $0x28] sm:$0xff]
    %v72 = vld [vmem:[#allocation7 + $0x30] sm:$0xff]
    %v73 = vld [vmem:[#allocation7 + $0x38] sm:$0xff]
    %v74 = vmul.f32 %v64, %v64
    %vm75 = vcmask 261120
    %v76 = vsel %vm75, %v74, 0.0
    %77 = vadd.xlane.f32.xlu0 %v76
    %v78 = vpop.xlane.xlu0 %77
    %v79 = vmul.f32 %v65, %v65
    %v80 = vsel %vm75, %v79, 0.0
    %81 = vadd.xlane.f32.xlu0 %v80
    %v82 = vpop.xlane.xlu0 %81
    %v83 = vmul.f32 %v66, %v66
    %v84 = vmul.f32 %v67, %v67
    %v85 = vmul.f32 %v68, %v68
    %v86 = vmul.f32 %v69, %v69
    %v87 = vmul.f32 %v70, %v70
    %v88 = vmul.f32 %v71, %v71
    %v89 = vmul.f32 %v72, %v72
    %v90 = vmul.f32 %v73, %v73
    %v91 = vsel %vm75, %v83, 0.0
    %92 = vadd.xlane.f32.xlu0 %v91
    %v93 = vpop.xlane.xlu0 %92
    %v94 = vsel %vm75, %v84, 0.0
    %95 = vadd.xlane.f32.xlu0 %v94
    %v96 = vpop.xlane.xlu0 %95
    %v97 = vsel %vm75, %v85, 0.0
    %98 = vadd.xlane.f32.xlu0 %v97
    %v99 = vpop.xlane.xlu0 %98
    %v100 = vsel %vm75, %v86, 0.0
    %101 = vadd.xlane.f32.xlu0 %v100
    %v102 = vpop.xlane.xlu0 %101
    %v103 = vsel %vm75, %v87, 0.0
    %104 = vadd.xlane.f32.xlu0 %v103
    %v105 = vpop.xlane.xlu0 %104
    %v106 = vsel %vm75, %v88, 0.0
    %107 = vadd.xlane.f32.xlu0 %v106
    %v108 = vpop.xlane.xlu0 %107
    %v109 = vsel %vm75, %v89, 0.0
    %110 = vadd.xlane.f32.xlu0 %v109
    %v111 = vpop.xlane.xlu0 %110
    %v112 = vsel %vm75, %v90, 0.0
    %113 = vadd.xlane.f32.xlu0 %v112
    %v114 = vpop.xlane.xlu0 %113
    %v115 = vadd.f32 %v78, 1e-10
    %v116 = vrsqrt.pop %v115
    %v117 = vmul.f32 %v116, %v115
    %v118 = vmul.f32 %v117, %v116
    %v119 = vmul.f32 0.5, %v118
    %v120 = vsub.f32 1.5, %v119
    %v121 = vmul.f32 %v116, %v120
    %vm122 = vweird.f32 %v115
    %vm123 = vweird.f32 %v116
    %vm124 = vmor %vm122, %vm123
    %v125 = vsel %vm124, %v116, %v121
    %v126 = vadd.f32 %v82, 1e-10
    %v127 = vrsqrt.pop %v126
    %v128 = vmul.f32 %v127, %v126
    %v129 = vmul.f32 %v128, %v127
    %v130 = vmul.f32 0.5, %v129
    %v131 = vsub.f32 1.5, %v130
    %v132 = vmul.f32 %v127, %v131
    %vm133 = vweird.f32 %v126
    %vm134 = vweird.f32 %v127
    %vm135 = vmor %vm133, %vm134
    %v136 = vsel %vm135, %v127, %v132
    %v137 = vadd.f32 %v93, 1e-10
    %v138 = vadd.f32 %v96, 1e-10
    %v139 = vadd.f32 %v99, 1e-10
    %v140 = vadd.f32 %v102, 1e-10
    %v141 = vadd.f32 %v105, 1e-10
    %v142 = vadd.f32 %v108, 1e-10
    %v143 = vadd.f32 %v111, 1e-10
    %v144 = vadd.f32 %v114, 1e-10
    %v145 = vrsqrt.pop %v137
    %v146 = vmul.f32 %v145, %v137
    %v147 = vmul.f32 %v146, %v145
    %v148 = vmul.f32 0.5, %v147
    %v149 = vsub.f32 1.5, %v148
    %v150 = vmul.f32 %v145, %v149
    %vm151 = vweird.f32 %v137
    %vm152 = vweird.f32 %v145
    %vm153 = vmor %vm151, %vm152
    %v154 = vsel %vm153, %v145, %v150
    %v155 = vrsqrt.pop %v138
    %v156 = vmul.f32 %v155, %v138
    %v157 = vmul.f32 %v156, %v155
    %v158 = vmul.f32 0.5, %v157
    %v159 = vsub.f32 1.5, %v158
    %v160 = vmul.f32 %v155, %v159
    %vm161 = vweird.f32 %v138
    %vm162 = vweird.f32 %v155
    %vm163 = vmor %vm161, %vm162
    %v164 = vsel %vm163, %v155, %v160
    %v165 = vrsqrt.pop %v139
    %v166 = vmul.f32 %v165, %v139
    %v167 = vmul.f32 %v166, %v165
    %v168 = vmul.f32 0.5, %v167
    %v169 = vsub.f32 1.5, %v168
    %v170 = vmul.f32 %v165, %v169
    %vm171 = vweird.f32 %v139
    %vm172 = vweird.f32 %v165
    %vm173 = vmor %vm171, %vm172
    %v174 = vsel %vm173, %v165, %v170
    %v175 = vrsqrt.pop %v140
    %v176 = vmul.f32 %v175, %v140
    %v177 = vmul.f32 %v176, %v175
    %v178 = vmul.f32 0.5, %v177
    %v179 = vsub.f32 1.5, %v178
    %v180 = vmul.f32 %v175, %v179
    %vm181 = vweird.f32 %v140
    %vm182 = vweird.f32 %v175
    %vm183 = vmor %vm181, %vm182
    %v184 = vsel %vm183, %v175, %v180
    %v185 = vrsqrt.pop %v141
    %v186 = vmul.f32 %v185, %v141
    %v187 = vmul.f32 %v186, %v185
    %v188 = vmul.f32 0.5, %v187
    %v189 = vsub.f32 1.5, %v188
    %v190 = vmul.f32 %v185, %v189
    %vm191 = vweird.f32 %v141
    %vm192 = vweird.f32 %v185
    %vm193 = vmor %vm191, %vm192
    %v194 = vsel %vm193, %v185, %v190
    %v195 = vrsqrt.pop %v142
    %v196 = vmul.f32 %v195, %v142
    %v197 = vmul.f32 %v196, %v195
    %v198 = vmul.f32 0.5, %v197
    %v199 = vsub.f32 1.5, %v198
    %v200 = vmul.f32 %v195, %v199
    %vm201 = vweird.f32 %v142
    %vm202 = vweird.f32 %v195
    %vm203 = vmor %vm201, %vm202
    %v204 = vsel %vm203, %v195, %v200
    %v205 = vrsqrt.pop %v143
    %v206 = vmul.f32 %v205, %v143
    %v207 = vmul.f32 %v206, %v205
    %v208 = vmul.f32 0.5, %v207
    %v209 = vsub.f32 1.5, %v208
    %v210 = vmul.f32 %v205, %v209
    %vm211 = vweird.f32 %v143
    %vm212 = vweird.f32 %v205
    %vm213 = vmor %vm211, %vm212
    %v214 = vsel %vm213, %v205, %v210
    %v215 = vrsqrt.pop %v144
    %v216 = vmul.f32 %v215, %v144
    %v217 = vmul.f32 %v216, %v215
    %v218 = vmul.f32 0.5, %v217
    %v219 = vsub.f32 1.5, %v218
    %v220 = vmul.f32 %v215, %v219
    %vm221 = vweird.f32 %v144
    %vm222 = vweird.f32 %v215
    %vm223 = vmor %vm221, %vm222
    %v224 = vsel %vm223, %v215, %v220
    %v225 = vmul.f32 %v64, %v125
    %v226 = vmul.f32 %v65, %v136
    %v227 = vsub.f32 %v226, %v225
    %v228 = vmul.f32 %v227, %v227
    %v229 = vsel %vm75, %v228, 0.0
    %230 = vadd.xlane.f32.xlu0 %v229
    %v231 = vpop.xlane.xlu0 %230
    %v232 = vmul.f32 %v136, %v136
    %v233 = vmul.f32 %v82, %v232
    %v234 = vmul.f32 %v66, %v154
    %v235 = vmul.f32 %v67, %v164
    %v236 = vmul.f32 %v68, %v174
    %v237 = vmul.f32 %v69, %v184
    %v238 = vmul.f32 %v70, %v194
    %v239 = vmul.f32 %v71, %v204
    %v240 = vmul.f32 %v72, %v214
    %v241 = vmul.f32 %v73, %v224
    %v242 = vsel %vm75, %v234, 0.0
    %v243 = vrot.slane %v242, 4
    %v244 = vadd.f32 %v242, %v243
    %v245 = vrot.slane %v244, 2
    %v246 = vadd.f32 %v244, %v245
    %v247 = vrot.slane %v246, 1
    %v248 = vadd.f32 %v246, %v247
    %v249 = vsel %vm75, %v235, 0.0
    %v250 = vrot.slane %v249, 4
    %v251 = vadd.f32 %v249, %v250
    %v252 = vrot.slane %v251, 2
    %v253 = vadd.f32 %v251, %v252
    %v254 = vrot.slane %v253, 1
    %v255 = vadd.f32 %v253, %v254
    %v256 = vsel %vm75, %v236, 0.0
    %v257 = vrot.slane %v256, 4
    %v258 = vadd.f32 %v256, %v257
    %v259 = vrot.slane %v258, 2
    %v260 = vadd.f32 %v258, %v259
    %v261 = vrot.slane %v260, 1
    %v262 = vadd.f32 %v260, %v261
    %v263 = vsel %vm75, %v237, 0.0
    %v264 = vrot.slane %v263, 4
    %v265 = vadd.f32 %v263, %v264
    %v266 = vrot.slane %v265, 2
    %v267 = vadd.f32 %v265, %v266
    %v268 = vrot.slane %v267, 1
    %v269 = vadd.f32 %v267, %v268
    %v270 = vsel %vm75, %v238, 0.0
    %v271 = vrot.slane %v270, 4
    %v272 = vadd.f32 %v270, %v271
    %v273 = vrot.slane %v272, 2
    %v274 = vadd.f32 %v272, %v273
    %v275 = vrot.slane %v274, 1
    %v276 = vadd.f32 %v274, %v275
    %v277 = vsel %vm75, %v239, 0.0
    %v278 = vrot.slane %v277, 4
    %v279 = vadd.f32 %v277, %v278
    %v280 = vrot.slane %v279, 2
    %v281 = vadd.f32 %v279, %v280
    %v282 = vrot.slane %v281, 1
    %v283 = vadd.f32 %v281, %v282
    %v284 = vsel %vm75, %v240, 0.0
    %v285 = vrot.slane %v284, 4
    %v286 = vadd.f32 %v284, %v285
    %v287 = vrot.slane %v286, 2
    %v288 = vadd.f32 %v286, %v287
    %v289 = vrot.slane %v288, 1
    %v290 = vadd.f32 %v288, %v289
    %v291 = vsel %vm75, %v241, 0.0
    %v292 = vrot.slane %v291, 4
    %v293 = vadd.f32 %v291, %v292
    %v294 = vrot.slane %v293, 2
    %v295 = vadd.f32 %v293, %v294
    %v296 = vrot.slane %v295, 1
    %v297 = vadd.f32 %v295, %v296
    %v298 = vmul.f32 %v154, %v154
    %v299 = vmul.f32 %v164, %v164
    %v300 = vmul.f32 %v174, %v174
    %v301 = vmul.f32 %v184, %v184
    %v302 = vmul.f32 %v194, %v194
    %v303 = vmul.f32 %v204, %v204
    %v304 = vmul.f32 %v214, %v214
    %v305 = vmul.f32 %v224, %v224
    %v306 = vmul.f32 %v93, %v298
    %v307 = vmul.f32 %v96, %v299
    %v308 = vmul.f32 %v99, %v300
    %v309 = vmul.f32 %v102, %v301
    %v310 = vmul.f32 %v105, %v302
    %v311 = vmul.f32 %v108, %v303
    %v312 = vmul.f32 %v111, %v304
    %v313 = vmul.f32 %v114, %v305
    %v314 = vrot.slane %v306, 4
    %v315 = vadd.f32 %v306, %v314
    %v316 = vrot.slane %v315, 2
    %v317 = vadd.f32 %v315, %v316
    %v318 = vrot.slane %v317, 1
    %v319 = vadd.f32 %v317, %v318
    %v320 = vrot.slane %v307, 4
    %v321 = vadd.f32 %v307, %v320
    %v322 = vrot.slane %v321, 2
    %v323 = vadd.f32 %v321, %v322
    %v324 = vrot.slane %v323, 1
    %v325 = vadd.f32 %v323, %v324
    %v326 = vrot.slane %v308, 4
    %v327 = vadd.f32 %v308, %v326
    %v328 = vrot.slane %v327, 2
    %v329 = vadd.f32 %v327, %v328
    %v330 = vrot.slane %v329, 1
    %v331 = vadd.f32 %v329, %v330
    %v332 = vrot.slane %v309, 4
    %v333 = vadd.f32 %v309, %v332
    %v334 = vrot.slane %v333, 2
    %v335 = vadd.f32 %v333, %v334
    %v336 = vrot.slane %v335, 1
    %v337 = vadd.f32 %v335, %v336
    %v338 = vrot.slane %v310, 4
    %v339 = vadd.f32 %v310, %v338
    %v340 = vrot.slane %v339, 2
    %v341 = vadd.f32 %v339, %v340
    %v342 = vrot.slane %v341, 1
    %v343 = vadd.f32 %v341, %v342
    %v344 = vrot.slane %v311, 4
    %v345 = vadd.f32 %v311, %v344
    %v346 = vrot.slane %v345, 2
    %v347 = vadd.f32 %v345, %v346
    %v348 = vrot.slane %v347, 1
    %v349 = vadd.f32 %v347, %v348
    %v350 = vrot.slane %v312, 4
    %v351 = vadd.f32 %v312, %v350
    %v352 = vrot.slane %v351, 2
    %v353 = vadd.f32 %v351, %v352
    %v354 = vrot.slane %v353, 1
    %v355 = vadd.f32 %v353, %v354
    %v356 = vrot.slane %v313, 4
    %v357 = vadd.f32 %v313, %v356
    %v358 = vrot.slane %v357, 2
    %v359 = vadd.f32 %v357, %v358
    %v360 = vrot.slane %v359, 1
    %v361 = vadd.f32 %v359, %v360
    %vm370 = vcmask 1041409
    %v371 = vsel %vm370, %v255, %v248
    %vm372 = vcmask 1042434
    %v373 = vsel %vm372, %v262, %v371
    %vm374 = vcmask 1043459
    %v375 = vsel %vm374, %v269, %v373
    %vm376 = vcmask 1044484
    %v377 = vsel %vm376, %v276, %v375
    %vm378 = vcmask 1045509
    %v379 = vsel %vm378, %v283, %v377
    %vm380 = vcmask 1046534
    %v381 = vsel %vm380, %v290, %v379
    %vm382 = vcmask 1047559
    %v383 = vsel %vm382, %v297, %v381
    %v385 = vmul.f32 %v226, %v383
    %v386 = vsel %vm75, %v385, 0.0
    %387 = vadd.xlane.f32.xlu0 %v386
    %v388 = vpop.xlane.xlu0 %387
    %v389 = vmul.f32 %v233, 8.0
    %v390 = vmul.f32 %v388, 2.0
    %v391 = vsub.f32 %v389, %v390
    %v400 = vsel %vm370, %v325, %v319
    %v401 = vsel %vm372, %v331, %v400
    %v402 = vsel %vm374, %v337, %v401
    %v403 = vsel %vm376, %v343, %v402
    %v404 = vsel %vm378, %v349, %v403
    %v405 = vsel %vm380, %v355, %v404
    %v406 = vsel %vm382, %v361, %v405
    %v408 = vadd.f32 %v391, %v406
    %v409 = vmul.f32 %v408, 0.03125
    %vm410 = vcmp.lt.f32.partialorder %v409, %v231
    %v411 = vsub.f32 %v231, %v409
    %v412 = vadd.f32 %v411, 0.2
    %v413 = vmax.f32 %v412, 0.0
    %v414 = vsel %vm410, %v413, 0.0
    %v415 = vld [vmem:[#allocation8] sm:$0x1]
    %vm416 = vcmask 7168
    %v417 = vsel %vm416, %v414, 0.0
    %v418 = vrot.slane %v417, 4
    %v419 = vadd.f32 %v417, %v418
    %v420 = vrot.slane %v419, 2
    %v421 = vadd.f32 %v419, %v420
    %v422 = vrot.slane %v421, 1
    %v423 = vadd.f32 %v421, %v422
    %v424 = vadd.f32 %v415, %v423
    %vm425 = vcmask 0
    %426 = vst.msk [vmem:[#allocation8] sm:$0x1] %vm425, %v424
    // Predicated region
    $region30: #{tpu_custom_call.1} parent=1 // pred_check
      _
    $region31: #{tpu_custom_call.1} parent=1 // pred_check_branch
      %428 = sbr.rel (0) target = $region33
    $region32: #{tpu_custom_call.1} parent=1 // pred_region
      %430 = vsyncadd [#allocation4], 0
      %s432 = sshll.u32 [#allocation8], 4
      %s433 = int_to_ptr.vmem [resolvable:$true] %s432
      %s434 = sshll.u32 %s3, 4
      %s435 = int_to_ptr.hbm [resolvable:$true] %s434
      %437 = dma.vmem_to_hbm [thread:$0]  %s433, 16, %s435, [#allocation4]
    $region33: #{tpu_custom_call.1} parent=1 // pred_fallthru
      _
    // Predicated region
    $region34: #{tpu_custom_call.1} parent=1 // pred_check
      _
    $region35: #{tpu_custom_call.1} parent=1 // pred_check_branch
      %439 = sbr.rel (0) target = $region37
    $region36: #{tpu_custom_call.1} parent=1 // pred_region
      %441 = dma.done [#allocation4], 16
    $region37: #{tpu_custom_call.1} parent=1 // pred_fallthru
      _
    %442 = vsyncpa [#allocation3], 1
    %443 = vsyncpa [#allocation6], 1
    %444 = vsyncpa [#allocation4], 1

</llo_original>
